<compile_context>
chip_gen: v6e
topology: v6e:2x2x1
jax: 0.10.0
libtpu: 0.0.40
codegen_flags: <defaults>
</compile_context>

<pallas_src>
import jax
import jax.numpy as jnp
from jax.experimental import pallas as pl
from jax.experimental.pallas import tpu as pltpu


def _round_up(x, m):
    return (x + m - 1) // m * m


def _sublane_tile(dtype):
    # Minimum second-to-last tile dim per dtype width (f32: 8, bf16: 16, 8-bit: 32).
    return {4: 8, 2: 16, 1: 32}.get(jnp.dtype(dtype).itemsize, 8)


def _vmem_capacity_bytes():
    try:
        info = pltpu.get_tpu_info()
        for attr in ("vmem_capacity_bytes", "vmem_bytes", "vmem_size_bytes"):
            v = getattr(info, attr, None)
            if v:
                return int(v)
    except Exception:
        pass
    return 64 * 1024 * 1024  # conservative fallback (v7x-class per-TC capacity)


# --------------------------------------------------------------------------
# Kernels
# --------------------------------------------------------------------------

def _linear_lora_kernel(x_ref, w_ref, bias_ref, a_ref, b_ref, o_ref):
    # x_ref:    (TM, in_pad)
    # w_ref:    (in_pad, TN)      frozen base weight slice (x-major)
    # bias_ref: (1, TN)           f32
    # a_ref:    (in_pad, rank)
    # b_ref:    (rank, TN)        LoRA scaling already folded in (f32-scaled)
    # o_ref:    (TM, TN)
    x = x_ref[...]
    acc = jnp.dot(x, w_ref[...], preferred_element_type=jnp.float32)
    xa = jnp.dot(x, a_ref[...], preferred_element_type=jnp.float32)
    acc = acc + jnp.dot(xa.astype(b_ref.dtype), b_ref[...],
                        preferred_element_type=jnp.float32)
    o_ref[...] = (acc + bias_ref[...]).astype(o_ref.dtype)


def _linear_bias_kernel(x_ref, w_ref, bias_ref, o_ref):
    # Merged-adapter path: W already contains W + scaling*(A@B).
    acc = jnp.dot(x_ref[...], w_ref[...], preferred_element_type=jnp.float32)
    o_ref[...] = (acc + bias_ref[...]).astype(o_ref.dtype)


# --------------------------------------------------------------------------
# Tiling / VMEM sizing
# --------------------------------------------------------------------------

def _select_tiles(M, in_pad, out_pad, rank, compute_dtype, out_dtype, budget, sublane):
    bpe_c = jnp.dtype(compute_dtype).itemsize
    bpe_out = jnp.dtype(out_dtype).itemsize
    rank_lanes = _round_up(rank, 128)      # A's lane footprint in VMEM
    rank_sub = _round_up(rank, sublane)    # B's sublane footprint in VMEM

    def fixed_bytes(tn):
        # Constant-index blocks are still double-buffered by default (2x).
        return (2 * bpe_c * (in_pad * tn + in_pad * rank_lanes + rank_sub * tn)
                + 2 * 4 * 8 * tn)          # f32 bias, sublane-padded

    # Lane tile over out_dim: prefer the full lane-dense width, shrink only
    # if the resident weight slice would not leave room for a minimal row tile.
    tn = 128
    for cand in (out_pad, 2048, 1536, 1024, 512, 256, 128):
        if cand > out_pad or out_pad % cand:
            continue
        min_tiles = 2 * sublane * (in_pad * bpe_c + cand * bpe_out)
        if fixed_bytes(cand) + min_tiles <= budget:
            tn = cand
            break
    fixed = fixed_bytes(tn)

    # Row tile: largest multiple of the dtype sublane tile that fits.
    m_ceiling = _round_up(max(M, sublane), sublane)
    tm = sublane
    for cand in (1024, 512, 256, 128, 64, 32, 16, 8):
        if cand % sublane or cand > max(m_ceiling, sublane):
            continue
        if fixed + 2 * cand * (in_pad * bpe_c + tn * bpe_out) <= budget:
            tm = cand
            break

    # Guarantee >= 2 grid steps when possible so v7x's 2nd TensorCore has work.
    grid_m = _round_up(max(M, tm), tm) // tm
    grid_n = out_pad // tn
    if grid_m * grid_n < 2 and tm >= 2 * sublane and (tm // 2) % sublane == 0:
        tm //= 2

    return tm, tn


# --------------------------------------------------------------------------
# Parameter preparation (hoisted out of the per-call path)
# --------------------------------------------------------------------------

def _prepare_params(W, bias, A, B, alpha, compute_dtype, merge_adapter):
    in_dim, out_dim = W.shape
    rank = A.shape[1]
    assert A.shape[0] == in_dim and B.shape == (rank, out_dim)
    scaling = alpha / rank

    in_pad = _round_up(in_dim, 128)
    out_pad = _round_up(out_dim, 128)

    W32 = W.astype(jnp.float32)
    A32 = A.astype(jnp.float32)
    B32 = B.astype(jnp.float32) * scaling  # fold scaling into B in f32
    bias32 = bias.astype(jnp.float32)

    if merge_adapter:
        W32 = W32 + A32 @ B32               # W_eff = W + scaling*(A@B)

    W_c = jnp.pad(W32, ((0, in_pad - in_dim), (0, out_pad - out_dim))).astype(compute_dtype)
    bias2d = jnp.pad(bias32, (0, out_pad - out_dim)).reshape(1, out_pad)

    if merge_adapter:
        A_c, B_c = None, None
    else:
        A_c = jnp.pad(A32, ((0, in_pad - in_dim), (0, 0))).astype(compute_dtype)
        B_c = jnp.pad(B32, ((0, 0), (0, out_pad - out_dim))).astype(compute_dtype)

    meta = (in_dim, out_dim, rank, in_pad, out_pad)
    return (W_c, bias2d, A_c, B_c), meta


# --------------------------------------------------------------------------
# Forward
# --------------------------------------------------------------------------

def _forward_padded(x, params, meta, compute_dtype, out_dtype):
    W_c, bias2d, A_c, B_c = params
    in_dim, out_dim, rank, in_pad, out_pad = meta
    merged = A_c is None

    assert x.shape[-1] == in_dim
    lead = x.shape[:-1]
    M = 1
    for d in lead:
        M *= d

    x2d = x.reshape(M, in_dim).astype(compute_dtype)
    if in_pad != in_dim:
        x2d = jnp.pad(x2d, ((0, 0), (0, in_pad - in_dim)))

    sublane = _sublane_tile(compute_dtype)
    cap = _vmem_capacity_bytes()
    vmem_limit = max(32 * 1024 * 1024, min(cap // 2, 96 * 1024 * 1024))
    budget = int(vmem_limit * 0.85)

    TM, TN = _select_tiles(M, in_pad, out_pad, 0 if merged else rank,
                           compute_dtype, out_dtype, budget, sublane)

    M_pad = _round_up(max(M, TM), TM)
    if M_pad != M:
        x2d = jnp.pad(x2d, ((0, M_pad - M), (0, 0)))
    grid = (M_pad // TM, out_pad // TN)

    bpe_c = jnp.dtype(compute_dtype).itemsize
    flops = 2 * M_pad * in_pad * out_pad
    bytes_accessed = ((M_pad * in_pad + in_pad * out_pad) * bpe_c
                      + out_pad * 4
                      + M_pad * out_pad * jnp.dtype(out_dtype).itemsize)
    if not merged:
        flops += 2 * M_pad * rank * (in_pad + out_pad)
        bytes_accessed += (in_pad * rank + rank * out_pad) * bpe_c

    common = dict(
        out_shape=jax.ShapeDtypeStruct((M_pad, out_pad), out_dtype),
        compiler_params=pltpu.CompilerParams(
            dimension_semantics=("parallel", "parallel"),
            vmem_limit_bytes=vmem_limit,
        ),
        cost_estimate=pl.CostEstimate(flops=flops, transcendentals=0,
                                      bytes_accessed=bytes_accessed),
    )

    if merged:
        out = pl.pallas_call(
            _linear_bias_kernel,
            grid_spec=pltpu.PrefetchScalarGridSpec(
                num_scalar_prefetch=0,
                grid=grid,
                in_specs=[
                    pl.BlockSpec((TM, in_pad), lambda i, j: (i, 0)),
                    pl.BlockSpec((in_pad, TN), lambda i, j: (0, j)),
                    pl.BlockSpec((1, TN), lambda i, j: (0, j)),
                ],
                out_specs=pl.BlockSpec((TM, TN), lambda i, j: (i, j)),
            ),
            **common,
        )(x2d, W_c, bias2d)
    else:
        out = pl.pallas_call(
            _linear_lora_kernel,
            grid_spec=pltpu.PrefetchScalarGridSpec(
                num_scalar_prefetch=0,
                grid=grid,
                in_specs=[
                    pl.BlockSpec((TM, in_pad), lambda i, j: (i, 0)),
                    pl.BlockSpec((in_pad, TN), lambda i, j: (0, j)),
                    pl.BlockSpec((1, TN), lambda i, j: (0, j)),
                    pl.BlockSpec((in_pad, rank), lambda i, j: (0, 0)),
                    pl.BlockSpec((rank, TN), lambda i, j: (0, j)),
                ],
                out_specs=pl.BlockSpec((TM, TN), lambda i, j: (i, j)),
            ),
            **common,
        )(x2d, W_c, bias2d, A_c, B_c)

    return out[:M, :out_dim].reshape(*lead, out_dim)


def make_linear_with_lora(W, bias, A, B, *, alpha=16, compute_dtype=jnp.bfloat16,
                          out_dtype=None, merge_adapter=False):
    """Prepare padded/cast parameters once; return a jitted forward closure."""
    params, meta = _prepare_params(W, bias, A, B, alpha, compute_dtype, merge_adapter)

    @jax.jit
    def forward(x):
        od = out_dtype if out_dtype is not None else x.dtype
        return _forward_padded(x, params, meta, compute_dtype, od)

    return forward


def linear_with_lora_forward(x, W, bias, A, B, alpha=16, compute_dtype=jnp.bfloat16,
                             out_dtype=None, merge_adapter=False):
    """y = x @ W + bias + (alpha/rank) * (x @ A @ B). Convenience single-call API."""
    params, meta = _prepare_params(W, bias, A, B, alpha, compute_dtype, merge_adapter)
    od = out_dtype if out_dtype is not None else x.dtype
    return _forward_padded(x, params, meta, compute_dtype, od)


if __name__ == "__main__":
    key = jax.random.PRNGKey(0)
    kx, kw, kb, ka, kbb = jax.random.split(key, 5)

    batch, seq, in_dim, out_dim, rank, alpha = 2, 8, 128, 128, 16, 16

    x = jax.random.normal(kx, (batch, seq, in_dim), dtype=jnp.float32)
    # Frozen base linear (stored x-major: (in_dim, out_dim)).
    W = jax.random.normal(kw, (in_dim, out_dim), dtype=jnp.float32) * 0.02
    bias = jax.random.normal(kb, (out_dim,), dtype=jnp.float32) * 0.01
    # LoRA params. The PyTorch module inits B = zeros; the test uses a nonzero
    # B so the LoRA matmul + scaling path is actually exercised numerically.
    A = jax.random.normal(ka, (in_dim, rank), dtype=jnp.float32) * 0.01
    B = jax.random.normal(kbb, (rank, out_dim), dtype=jnp.float32) * 0.5

    scaling = alpha / rank
    y_ref = x @ W + bias + scaling * ((x @ A) @ B)

    # 1) Default bf16 compute, fused LoRA path, parameters prepared once.
    fwd = make_linear_with_lora(W, bias, A, B, alpha=alpha)
    y = fwd(x)
    jax.block_until_ready(y)
    assert y.shape == (batch, seq, out_dim)
    err_bf16 = float(jnp.max(jnp.abs(y.astype(jnp.float32) - y_ref)))
    assert jnp.allclose(y.astype(jnp.float32), y_ref, atol=5e-2, rtol=5e-2), err_bf16

    # 2) f32 compute, fused LoRA path (tighter numerical check).
    y32 = linear_with_lora_forward(x, W, bias, A, B, alpha=alpha,
                                   compute_dtype=jnp.float32)
    jax.block_until_ready(y32)
    err_f32 = float(jnp.max(jnp.abs(y32 - y_ref)))
    assert jnp.allclose(y32, y_ref, atol=2e-2, rtol=2e-2), err_f32

    # 3) Merged-adapter inference path (single GEMM + bias kernel).
    y_m = linear_with_lora_forward(x, W, bias, A, B, alpha=alpha,
                                   merge_adapter=True)
    jax.block_until_ready(y_m)
    err_m = float(jnp.max(jnp.abs(y_m.astype(jnp.float32) - y_ref)))
    assert jnp.allclose(y_m.astype(jnp.float32), y_ref, atol=5e-2, rtol=5e-2), err_m

    print("KERNEL_OK")
</pallas_src>

<mosaic_0001>
module attributes {stable_mosaic.version = 11 : i64} {
  func.func @_linear_lora_kernel(%arg0: i32, %arg1: i32, %arg2: memref<16x128xbf16, #tpu.memory_space<vmem>>, %arg3: memref<128x128xbf16, #tpu.memory_space<vmem>>, %arg4: memref<1x128xf32, #tpu.memory_space<vmem>>, %arg5: memref<128x16xbf16, #tpu.memory_space<vmem>>, %arg6: memref<16x128xbf16, #tpu.memory_space<vmem>>, %arg7: memref<16x128xf32, #tpu.memory_space<vmem>>) attributes {dimension_semantics = [#tpu.dimension_semantics<parallel>, #tpu.dimension_semantics<parallel>], iteration_bounds = array<i64: 1, 1>, scalar_prefetch = 0 : i64, scratch_operands = 0 : i64, tpu.core_type = #tpu.core_type<tc>, window_params = [{transform_indices = @transform_0, window_bounds = array<i64: 16, 128>}, {transform_indices = @transform_1, window_bounds = array<i64: 128, 128>}, {transform_indices = @transform_2, window_bounds = array<i64: 1, 128>}, {pipeline_mode = #tpu.pipeline_mode<synchronous>, transform_indices = @transform_3, window_bounds = array<i64: 128, 16>}, {transform_indices = @transform_4, window_bounds = array<i64: 16, 128>}, {transform_indices = @transform_5, window_bounds = array<i64: 16, 128>}]} {
    %c0 = arith.constant 0 : index
    %c0_0 = arith.constant 0 : index
    %0 = vector.load %arg2[%c0, %c0_0] : memref<16x128xbf16, #tpu.memory_space<vmem>>, vector<16x128xbf16>
    %c0_1 = arith.constant 0 : index
    %c0_2 = arith.constant 0 : index
    %1 = vector.load %arg3[%c0_1, %c0_2] : memref<128x128xbf16, #tpu.memory_space<vmem>>, vector<128x128xbf16>
    %cst = arith.constant dense<0.000000e+00> : vector<16x128xf32>
    %2 = tpu.matmul %0, %1, %cst {dimension_numbers = #tpu.dot_dimension_numbers<[1], [0], [0], [1], [0, 0, 1, 1], [], []>} : vector<16x128xbf16>, vector<128x128xbf16>, vector<16x128xf32> -> vector<16x128xf32>
    %c0_3 = arith.constant 0 : index
    %c0_4 = arith.constant 0 : index
    %3 = vector.load %arg5[%c0_3, %c0_4] : memref<128x16xbf16, #tpu.memory_space<vmem>>, vector<128x16xbf16>
    %cst_5 = arith.constant dense<0.000000e+00> : vector<16x16xf32>
    %4 = tpu.matmul %0, %3, %cst_5 {dimension_numbers = #tpu.dot_dimension_numbers<[1], [0], [0], [1], [0, 0, 1, 1], [], []>} : vector<16x128xbf16>, vector<128x16xbf16>, vector<16x16xf32> -> vector<16x16xf32>
    %5 = arith.truncf %4 : vector<16x16xf32> to vector<16x16xbf16>
    %c0_6 = arith.constant 0 : index
    %c0_7 = arith.constant 0 : index
    %6 = vector.load %arg6[%c0_6, %c0_7] : memref<16x128xbf16, #tpu.memory_space<vmem>>, vector<16x128xbf16>
    %cst_8 = arith.constant dense<0.000000e+00> : vector<16x128xf32>
    %7 = tpu.matmul %5, %6, %cst_8 {dimension_numbers = #tpu.dot_dimension_numbers<[1], [0], [0], [1], [0, 0, 1, 1], [], []>} : vector<16x16xbf16>, vector<16x128xbf16>, vector<16x128xf32> -> vector<16x128xf32>
    %8 = arith.addf %2, %7 : vector<16x128xf32>
    %c0_9 = arith.constant 0 : index
    %c0_10 = arith.constant 0 : index
    %9 = vector.load %arg4[%c0_9, %c0_10] : memref<1x128xf32, #tpu.memory_space<vmem>>, vector<1x128xf32>
    %10 = vector.broadcast %9 : vector<1x128xf32> to vector<16x128xf32>
    %11 = arith.addf %8, %10 : vector<16x128xf32>
    %c0_11 = arith.constant 0 : index
    %c0_12 = arith.constant 0 : index
    %12 = vector.load %arg7[%c0_11, %c0_12] : memref<16x128xf32, #tpu.memory_space<vmem>>, vector<16x128xf32>
    tpu.vector_store %arg7[%c0_11, %c0_12], %11 {strides = array<i32>} : memref<16x128xf32, #tpu.memory_space<vmem>>, vector<16x128xf32>,
    return
  }
  func.func @transform_0(%arg0: i32, %arg1: i32) -> (i32, i32) {
    %c0_i32 = arith.constant 0 : i32
    %c0_i32_0 = arith.constant 0 : i32
    return %arg0, %c0_i32 : i32, i32
  }
  func.func @transform_1(%arg0: i32, %arg1: i32) -> (i32, i32) {
    %c0_i32 = arith.constant 0 : i32
    %c0_i32_0 = arith.constant 0 : i32
    return %c0_i32, %arg1 : i32, i32
  }
  func.func @transform_2(%arg0: i32, %arg1: i32) -> (i32, i32) {
    %c0_i32 = arith.constant 0 : i32
    %c0_i32_0 = arith.constant 0 : i32
    return %c0_i32, %arg1 : i32, i32
  }
  func.func @transform_3(%arg0: i32, %arg1: i32) -> (i32, i32) {
    %c0_i32 = arith.constant 0 : i32
    %c0_i32_0 = arith.constant 0 : i32
    %c0_i32_1 = arith.constant 0 : i32
    return %c0_i32, %c0_i32_0 : i32, i32
  }
  func.func @transform_4(%arg0: i32, %arg1: i32) -> (i32, i32) {
    %c0_i32 = arith.constant 0 : i32
    %c0_i32_0 = arith.constant 0 : i32
    return %c0_i32, %arg1 : i32, i32
  }
  func.func @transform_5(%arg0: i32, %arg1: i32) -> (i32, i32) {
    %c0_i32 = arith.constant 0 : i32
    return %arg0, %arg1 : i32, i32
  }
}

</mosaic_0001>

<llo_original>
// kernel: forward.1
$region0: #{forward.1}
  #allocation0 [shape = 'u32[]', space=smem, size = 0x4, offset = 0x4, fixed_abs, tag = 'smem constant byte address 0x4 - core index']
  #allocation1 [shape = 'u32[144,128]{1,0:T(1,128)}', space=vmem, size = 0x12000, scoped, tag = 'internal scratch']
  %s0 = inlined_call_operand.vmem [shape: bf16[16,128], index: 0, kind: input, shape index: {}]
  %s1 = inlined_call_operand.hbm [shape: bf16[128,128], index: 1, kind: input, shape index: {}]
  %s2 = inlined_call_operand.vmem [shape: f32[1,128], index: 2, kind: input, shape index: {}]
  %s3 = inlined_call_operand.hbm [shape: bf16[128,16], index: 3, kind: input, shape index: {}]
  %s4 = inlined_call_operand.vmem [shape: bf16[16,128], index: 4, kind: input, shape index: {}]
  %s5 = inlined_call_operand.hbm [shape: f32[16,128], index: 5, kind: output, shape index: {}]
  %s6 = sld [smem:[#allocation0]]
  $region38: #{forward.1} parent=0
    _
  %s8 = ssub.s32 1, %s6
  %s9 = scalar_select 0, %s8, %s6
  $region1: #{forward.1} parent=0
    #allocation2 [shape = 'u8[32768]{0}', space=vmem, size = 0x8000, scoped, tag = 'input window, operand 1, single buffered']
    #allocation3 [shape = 's32[1]{0}', space=sflag, size = 0x4, scoped, tag = 'scoped memory for forward.1']
    #allocation4 [shape = 's32[1]{0}', space=sflag, size = 0x4, scoped, tag = 'scoped memory for forward.1']
    #allocation5 [shape = 'u8[32768]{0}', space=vmem, size = 0x8000, scoped, tag = 'input window, operand 3, single buffered']
    #allocation6 [shape = 's32[1]{0}', space=sflag, size = 0x4, scoped, tag = 'scoped memory for forward.1']
    #allocation7 [shape = 'u8[8192]{0}', space=vmem, size = 0x2000, scoped, tag = 'output window, operand 0, single buffered']
    %10 = vsyncpa [#allocation3], 0
    %11 = vsyncpa [#allocation6], 0
    %12 = vsyncpa [#allocation4], 0
    // Predicated region
    $region2: #{forward.1} parent=1 // pred_check
      _
    $region3: #{forward.1} parent=1 // pred_check_branch
      %14 = sbr.rel (0) target = $region5
    $region4: #{forward.1} parent=1 // pred_region
      _
    $region5: #{forward.1} parent=1 // pred_fallthru
      _
    // Predicated region
    $region6: #{forward.1} parent=1 // pred_check
      _
    $region7: #{forward.1} parent=1 // pred_check_branch
      %16 = sbr.rel (0) target = $region9
    $region8: #{forward.1} parent=1 // pred_region
      %s18 = ssub.s32 1024, 1024
      %19 = vsyncadd [#allocation3], %s18
      %s20 = sshll.u32 [#allocation2], 4
      %s21 = int_to_ptr.vmem [resolvable:$true] %s20
      %26 = dma.hbm_to_vmem [thread:$0]  %s1, 1024, %s21, [#allocation3], 64, 64, 4
    $region9: #{forward.1} parent=1 // pred_fallthru
      _
    // Predicated region
    $region10: #{forward.1} parent=1 // pred_check
      _
    $region11: #{forward.1} parent=1 // pred_check_branch
      %28 = sbr.rel (0) target = $region13
    $region12: #{forward.1} parent=1 // pred_region
      _
    $region13: #{forward.1} parent=1 // pred_fallthru
      _
    // Predicated region
    $region14: #{forward.1} parent=1 // pred_check
      _
    $region15: #{forward.1} parent=1 // pred_check_branch
      %30 = sbr.rel (0) target = $region17
    $region16: #{forward.1} parent=1 // pred_region
      %s32 = ssub.s32 1024, 1024
      %33 = vsyncadd [#allocation6], %s32
      %s34 = sshll.u32 [#allocation5], 4
      %s35 = int_to_ptr.vmem [resolvable:$true] %s34
      %40 = dma.hbm_to_vmem [thread:$0]  %s3, 1024, %s35, [#allocation6], 64, 64, 4
    $region17: #{forward.1} parent=1 // pred_fallthru
      _
    // Predicated region
    $region18: #{forward.1} parent=1 // pred_check
      _
    $region19: #{forward.1} parent=1 // pred_check_branch
      %42 = sbr.rel (0) target = $region21
    $region20: #{forward.1} parent=1 // pred_region
      _
    $region21: #{forward.1} parent=1 // pred_fallthru
      _
    // Predicated region
    $region22: #{forward.1} parent=1 // pred_check
      _
    $region23: #{forward.1} parent=1 // pred_check_branch
      %44 = sbr.rel (0) target = $region25
    $region24: #{forward.1} parent=1 // pred_region
      %45 = dma.done [#allocation3], 1024
    $region25: #{forward.1} parent=1 // pred_fallthru
      _
    // Predicated region
    $region26: #{forward.1} parent=1 // pred_check
      _
    $region27: #{forward.1} parent=1 // pred_check_branch
      %47 = sbr.rel (0) target = $region29
    $region28: #{forward.1} parent=1 // pred_region
      %48 = dma.done [#allocation6], 1024
    $region29: #{forward.1} parent=1 // pred_fallthru
      _
    %v50 = vld [vmem:[%s0] sm:$0xf]
    %v51 = vld [vmem:[%s0 + $0x4] sm:$0xf]
    %v52 = vld [vmem:[#allocation2] sm:$0xf]
    %v53 = vld [vmem:[#allocation2 + $0x4] sm:$0xf]
    %v54 = vld [vmem:[#allocation2 + $0x8] sm:$0xf]
    %v55 = vld [vmem:[#allocation2 + $0xc] sm:$0xf]
    %v56 = vld [vmem:[#allocation2 + $0x10] sm:$0xf]
    %v57 = vld [vmem:[#allocation2 + $0x14] sm:$0xf]
    %v58 = vld [vmem:[#allocation2 + $0x18] sm:$0xf]
    %v59 = vld [vmem:[#allocation2 + $0x1c] sm:$0xf]
    %v60 = vld [vmem:[#allocation2 + $0x20] sm:$0xf]
    %v61 = vld [vmem:[#allocation2 + $0x24] sm:$0xf]
    %v62 = vld [vmem:[#allocation2 + $0x28] sm:$0xf]
    %v63 = vld [vmem:[#allocation2 + $0x2c] sm:$0xf]
    %v64 = vld [vmem:[#allocation2 + $0x30] sm:$0xf]
    %v65 = vld [vmem:[#allocation2 + $0x34] sm:$0xf]
    %v66 = vld [vmem:[#allocation2 + $0x38] sm:$0xf]
    %v67 = vld [vmem:[#allocation2 + $0x3c] sm:$0xf]
    %v68 = vld [vmem:[#allocation5] sm:$0xf]
    %v69 = vld [vmem:[#allocation5 + $0x4] sm:$0xf]
    %v70 = vld [vmem:[#allocation5 + $0x8] sm:$0xf]
    %v71 = vld [vmem:[#allocation5 + $0xc] sm:$0xf]
    %v72 = vld [vmem:[#allocation5 + $0x10] sm:$0xf]
    %v73 = vld [vmem:[#allocation5 + $0x14] sm:$0xf]
    %v74 = vld [vmem:[#allocation5 + $0x18] sm:$0xf]
    %v75 = vld [vmem:[#allocation5 + $0x1c] sm:$0xf]
    %v76 = vld [vmem:[#allocation5 + $0x20] sm:$0xf]
    %v77 = vld [vmem:[#allocation5 + $0x24] sm:$0xf]
    %v78 = vld [vmem:[#allocation5 + $0x28] sm:$0xf]
    %v79 = vld [vmem:[#allocation5 + $0x2c] sm:$0xf]
    %v80 = vld [vmem:[#allocation5 + $0x30] sm:$0xf]
    %v81 = vld [vmem:[#allocation5 + $0x34] sm:$0xf]
    %v82 = vld [vmem:[#allocation5 + $0x38] sm:$0xf]
    %v83 = vld [vmem:[#allocation5 + $0x3c] sm:$0xf]
    %v86 = vunpack.c.l.b16 %v50
    %v87 = vunpack.c.l.b16 %v51
    %v88 = vpack.c.b16 %v87, %v86
    %v106 = vunpack.c.l.b16 %v68
    %v107 = vunpack.c.l.b16 %v69
    %v108 = vunpack.c.l.b16 %v70
    %v109 = vunpack.c.l.b16 %v71
    %v110 = vunpack.c.l.b16 %v72
    %v111 = vunpack.c.l.b16 %v73
    %v112 = vunpack.c.l.b16 %v74
    %v113 = vunpack.c.l.b16 %v75
    %v114 = vunpack.c.l.b16 %v76
    %v115 = vunpack.c.l.b16 %v77
    %v116 = vunpack.c.l.b16 %v78
    %v117 = vunpack.c.l.b16 %v79
    %v118 = vunpack.c.l.b16 %v80
    %v119 = vunpack.c.l.b16 %v81
    %v120 = vunpack.c.l.b16 %v82
    %v121 = vunpack.c.l.b16 %v83
    %v122 = vpack.c.b16 %v107, %v106
    %v123 = vpack.c.b16 %v109, %v108
    %v124 = vpack.c.b16 %v111, %v110
    %v125 = vpack.c.b16 %v113, %v112
    %v126 = vpack.c.b16 %v115, %v114
    %v127 = vpack.c.b16 %v117, %v116
    %v128 = vpack.c.b16 %v119, %v118
    %v129 = vpack.c.b16 %v121, %v120
    %138 = vmatprep.subr.bf16.mxu0 0
    %139 = vmatpush1.bf16.msra.mxu0 %v129
    %140 = vmatprep.subr.bf16.mxu0 0
    %141 = vmatpush1.bf16.msra.mxu0 %v128
    %142 = vmatprep.subr.bf16.mxu0 0
    %143 = vmatpush1.bf16.msra.mxu0 %v127
    %144 = vmatprep.subr.bf16.mxu0 0
    %145 = vmatpush1.bf16.msra.mxu0 %v126
    %146 = vmatprep.subr.bf16.mxu0 0
    %147 = vmatpush1.bf16.msra.mxu0 %v125
    %148 = vmatprep.subr.bf16.mxu0 0
    %149 = vmatpush1.bf16.msra.mxu0 %v124
    %150 = vmatprep.subr.bf16.mxu0 0
    %151 = vmatpush1.bf16.msra.mxu0 %v123
    %152 = vmatprep.subr.bf16.mxu0 0
    %153 = vmatpush1.bf16.msra.mxu0 %v122
    %154 = vmatprep.subr.bf16.mxu0 0
    %155 = vmatpush2.bf16.msra.mxu0 0
    %156 = vmatprep.subr.bf16.mxu0 0
    %157 = vmatpush2.bf16.msra.mxu0 0
    %158 = vmatprep.subr.bf16.mxu0 0
    %159 = vmatpush2.bf16.msra.mxu0 0
    %160 = vmatprep.subr.bf16.mxu0 0
    %161 = vmatpush2.bf16.msra.mxu0 0
    %162 = vmatprep.subr.bf16.mxu0 0
    %163 = vmatpush2.bf16.msra.mxu0 0
    %164 = vmatprep.subr.bf16.mxu0 0
    %165 = vmatpush2.bf16.msra.mxu0 0
    %166 = vmatprep.subr.bf16.mxu0 0
    %167 = vmatpush2.bf16.msra.mxu0 0
    %168 = vmatprep.subr.bf16.mxu0 0
    %169 = vmatpush2.bf16.msra.mxu0 0
    %170 = vmatprep.mubr.bf16.mxu0 0
    %171 = vmatmul.mubr.bf16.gmra.mxu0 %v88
    %v172 = vpop.f32.mrf.mxu0
    %v173 = vadd.f32 0.0, %v172
    %v174 = vpop.f32.mrf.mxu0
    %v175 = vpop.f32.mrf.mxu0
    %v176 = vadd.f32 0.0, %v175
    %v177 = vpop.f32.mrf.mxu0
    %178 = vdwg.mxu0
    %v179 = vpack.c.bf16 %v176, %v173
    %v180 = vld [vmem:[%s4] sm:$0xf]
    %v181 = vld [vmem:[%s4 + $0x4] sm:$0xf]
    %v184 = vunpack.c.l.b16 %v180
    %v185 = vunpack.c.l.b16 %v181
    %v186 = vpack.c.b16 %v185, %v184
    %vm188 = vcmask 130048
    %v190 = vsel %vm188, %v179, 0
    %192 = vmatprep.subr.bf16.mxu0 0
    %193 = vmatpush1.bf16.msra.mxu0 0
    %194 = vmatprep.subr.bf16.mxu0 0
    %195 = vmatpush1.bf16.msra.mxu0 0
    %196 = vmatprep.subr.bf16.mxu0 0
    %197 = vmatpush1.bf16.msra.mxu0 0
    %198 = vmatprep.subr.bf16.mxu0 0
    %199 = vmatpush1.bf16.msra.mxu0 0
    %200 = vmatprep.subr.bf16.mxu0 0
    %201 = vmatpush1.bf16.msra.mxu0 0
    %202 = vmatprep.subr.bf16.mxu0 0
    %203 = vmatpush1.bf16.msra.mxu0 0
    %204 = vmatprep.subr.bf16.mxu0 0
    %205 = vmatpush1.bf16.msra.mxu0 0
    %206 = vmatprep.subr.bf16.mxu0 0
    %207 = vmatpush1.bf16.msra.mxu0 %v186
    %208 = vmatprep.subr.bf16.mxu0 0
    %209 = vmatpush2.bf16.msra.mxu0 0
    %210 = vmatprep.subr.bf16.mxu0 0
    %211 = vmatpush2.bf16.msra.mxu0 0
    %212 = vmatprep.subr.bf16.mxu0 0
    %213 = vmatpush2.bf16.msra.mxu0 0
    %214 = vmatprep.subr.bf16.mxu0 0
    %215 = vmatpush2.bf16.msra.mxu0 0
    %216 = vmatprep.subr.bf16.mxu0 0
    %217 = vmatpush2.bf16.msra.mxu0 0
    %218 = vmatprep.subr.bf16.mxu0 0
    %219 = vmatpush2.bf16.msra.mxu0 0
    %220 = vmatprep.subr.bf16.mxu0 0
    %221 = vmatpush2.bf16.msra.mxu0 0
    %222 = vmatprep.subr.bf16.mxu0 0
    %223 = vmatpush2.bf16.msra.mxu0 0
    %224 = vmatprep.mubr.bf16.mxu0 0
    %225 = vmatmul.mubr.bf16.gmra.mxu0 %v190
    %v226 = vpop.f32.mrf.mxu0
    %v227 = vadd.f32 0.0, %v226
    %v228 = vpop.f32.mrf.mxu0
    %v229 = vpop.f32.mrf.mxu0
    %v230 = vadd.f32 0.0, %v229
    %v231 = vpop.f32.mrf.mxu0
    %232 = vdwg.mxu0
    %v249 = vunpack.c.l.b16 %v52
    %v250 = vunpack.c.l.b16 %v53
    %v251 = vunpack.c.l.b16 %v54
    %v252 = vunpack.c.l.b16 %v55
    %v253 = vunpack.c.l.b16 %v56
    %v254 = vunpack.c.l.b16 %v57
    %v255 = vunpack.c.l.b16 %v58
    %v256 = vunpack.c.l.b16 %v59
    %v257 = vunpack.c.l.b16 %v60
    %v258 = vunpack.c.l.b16 %v61
    %v259 = vunpack.c.l.b16 %v62
    %v260 = vunpack.c.l.b16 %v63
    %v261 = vunpack.c.l.b16 %v64
    %v262 = vunpack.c.l.b16 %v65
    %v263 = vunpack.c.l.b16 %v66
    %v264 = vunpack.c.l.b16 %v67
    %v265 = vpack.c.b16 %v250, %v249
    %v266 = vpack.c.b16 %v252, %v251
    %v267 = vpack.c.b16 %v254, %v253
    %v268 = vpack.c.b16 %v256, %v255
    %v269 = vpack.c.b16 %v258, %v257
    %v270 = vpack.c.b16 %v260, %v259
    %v271 = vpack.c.b16 %v262, %v261
    %v272 = vpack.c.b16 %v264, %v263
    %281 = vmatprep.subr.bf16.mxu0 0
    %282 = vmatpush1.bf16.msra.mxu0 %v272
    %283 = vmatprep.subr.bf16.mxu0 0
    %284 = vmatpush1.bf16.msra.mxu0 %v271
    %285 = vmatprep.subr.bf16.mxu0 0
    %286 = vmatpush1.bf16.msra.mxu0 %v270
    %287 = vmatprep.subr.bf16.mxu0 0
    %288 = vmatpush1.bf16.msra.mxu0 %v269
    %289 = vmatprep.subr.bf16.mxu0 0
    %290 = vmatpush1.bf16.msra.mxu0 %v268
    %291 = vmatprep.subr.bf16.mxu0 0
    %292 = vmatpush1.bf16.msra.mxu0 %v267
    %293 = vmatprep.subr.bf16.mxu0 0
    %294 = vmatpush1.bf16.msra.mxu0 %v266
    %295 = vmatprep.subr.bf16.mxu0 0
    %296 = vmatpush1.bf16.msra.mxu0 %v265
    %297 = vmatprep.subr.bf16.mxu0 0
    %298 = vmatpush2.bf16.msra.mxu0 0
    %299 = vmatprep.subr.bf16.mxu0 0
    %300 = vmatpush2.bf16.msra.mxu0 0
    %301 = vmatprep.subr.bf16.mxu0 0
    %302 = vmatpush2.bf16.msra.mxu0 0
    %303 = vmatprep.subr.bf16.mxu0 0
    %304 = vmatpush2.bf16.msra.mxu0 0
    %305 = vmatprep.subr.bf16.mxu0 0
    %306 = vmatpush2.bf16.msra.mxu0 0
    %307 = vmatprep.subr.bf16.mxu0 0
    %308 = vmatpush2.bf16.msra.mxu0 0
    %309 = vmatprep.subr.bf16.mxu0 0
    %310 = vmatpush2.bf16.msra.mxu0 0
    %311 = vmatprep.subr.bf16.mxu0 0
    %312 = vmatpush2.bf16.msra.mxu0 0
    %313 = vmatprep.mubr.bf16.mxu0 0
    %314 = vmatmul.mubr.bf16.gmra.mxu0 %v88
    %v315 = vpop.f32.mrf.mxu0
    %v316 = vadd.f32 %v227, %v315
    %v317 = vpop.f32.mrf.mxu0
    %v318 = vpop.f32.mrf.mxu0
    %v319 = vadd.f32 %v230, %v318
    %v320 = vpop.f32.mrf.mxu0
    %321 = vdwg.mxu0
    %v322 = vld [vmem:[%s2] sm:$0x1]
    %v324 = vlaneseq
    %v325 = vshrl.u32 %v324, 7
    %v326 = vsub.s32 0, %v325
    %v327 = vrot.slane %v322, %v326
    %v329 = vadd.f32 %v316, %v327
    %v330 = vadd.f32 %v319, %v327
    %331 = vst [vmem:[#allocation7] sm:$0xff] %v329
    %332 = vst [vmem:[#allocation7 + $0x8] sm:$0xff] %v330
    // Predicated region
    $region30: #{forward.1} parent=1 // pred_check
      _
    $region31: #{forward.1} parent=1 // pred_check_branch
      %334 = sbr.rel (0) target = $region33
    $region32: #{forward.1} parent=1 // pred_region
      %s336 = ssub.s32 256, 256
      %337 = vsyncadd [#allocation4], %s336
      %s338 = sshll.u32 [#allocation7], 4
      %s339 = int_to_ptr.vmem [resolvable:$true] %s338
      %344 = dma.vmem_to_hbm [thread:$0]  %s339, 256, %s5, [#allocation4], 128, 128, 8
    $region33: #{forward.1} parent=1 // pred_fallthru
      _
    // Predicated region
    $region34: #{forward.1} parent=1 // pred_check
      _
    $region35: #{forward.1} parent=1 // pred_check_branch
      %346 = sbr.rel (0) target = $region37
    $region36: #{forward.1} parent=1 // pred_region
      %347 = dma.done [#allocation4], 256
    $region37: #{forward.1} parent=1 // pred_fallthru
      _
    %348 = vsyncpa [#allocation3], 1
    %349 = vsyncpa [#allocation6], 1
    %350 = vsyncpa [#allocation4], 1

</llo_original>
